<compile_context>
chip_gen: v7x
topology: tpu7x:2x2x1
jax: 0.10.0
libtpu: 0.0.40
codegen_flags: <defaults>
</compile_context>

<pallas_src>
import numpy as np
import jax
import jax.numpy as jnp
from jax.experimental import pallas as pl
from jax.experimental.pallas import tpu as pltpu

EPS = 1e-5  # nn.InstanceNorm2d default eps


def _round_up(a, m):
    return (a + m - 1) // m * m


def _physical_vmem_bytes():
    """Best-effort physical VMEM query; conservative fallback (v7x per-TC)."""
    try:
        info = pltpu.get_tpu_info()
        for name in ("vmem_capacity_bytes", "vmem_size_bytes", "vmem_bytes"):
            v = getattr(info, name, None)
            if v:
                return int(v)
    except Exception:
        pass
    return 64 * 1024 * 1024


# --------------------------------------------------------------------------
# Pallas kernel: per-tap conv matmuls + masked InstanceNorm + GLU gating
# --------------------------------------------------------------------------
def _make_kernel(KH, KW, stride, PW, Lmp, cinp, chunk, n_valid, eps):
    C2 = 2 * chunk                    # fused main+gate channel rows (MXU M dim)
    inv_p = 1.0 / float(n_valid)      # 1 / (OH*OW), static

    def kernel(xs_ref,    # (1, S2*Cinp, Ltot)   stride-phase-split input
               w_ref,     # (1, KH*KW*2C, Cinp)  per-tap fused conv weights
               pb_ref,    # (1, 2C, 3)           [bias | gamma | beta]
               mask_ref,  # (1, Lmp)             1.0 on real output columns
               o_ref):    # (1, chunk, Lmp)      output (lane-dense)
        # --- convolution: sum over taps of (2C, Cin) x (Cin, Lmp) MXU dots ---
        acc = jnp.zeros((C2, Lmp), jnp.float32)
        for ki in range(KH):
            for kj in range(KW):
                ph = (ki % stride) * stride + (kj % stride)   # which phase
                off = (ki // stride) * PW + (kj // stride)    # lane offset
                xt = xs_ref[0, ph * cinp:(ph + 1) * cinp, off:off + Lmp]
                t = ki * KW + kj
                wt = w_ref[0, t * C2:(t + 1) * C2, :]
                acc = acc + jnp.dot(wt, xt, preferred_element_type=jnp.float32)

        pb = pb_ref[0].astype(jnp.float32)                    # (2C, 3)
        h = acc + pb[:, 0:1]                                  # conv bias

        # --- masked InstanceNorm (mean-shifted variance, folded affine) ------
        mask = mask_ref[...]                                  # (1, Lmp) f32
        m = jnp.sum(h * mask, axis=1, keepdims=True) * inv_p  # (2C, 1)
        cen = (h - m) * mask
        var = jnp.sum(cen * cen, axis=1, keepdims=True) * inv_p
        scale = pb[:, 1:2] * jax.lax.rsqrt(var + eps)         # gamma * rsqrt
        shift = pb[:, 2:3] - scale * m                        # beta - scale*mean
        n = h * scale + shift                                 # one FMA pass

        # --- GLU gating: first `chunk` rows signal, last `chunk` rows gate ---
        o_ref[0] = (n[:chunk] * jax.nn.sigmoid(n[chunk:])).astype(o_ref.dtype)

    return kernel


# --------------------------------------------------------------------------
# Wrapper
# --------------------------------------------------------------------------
def downsample_generator(x, params, kernel_size, stride, padding,
                         compute_dtype=jnp.bfloat16, cout_chunk=None):
    """x: (B, Cin, H, W) f32 -> (B, Cout, OH, OW) f32.

    compute_dtype: dtype of the matmul operands (bf16 default, f32 for exact
    checks); accumulation and all IN/GLU math stay f32.
    cout_chunk: output channels per grid step (rounded to 8); default covers
    up to 128 channels per step (use ~128 on v7x so both TCs get work at B=1).
    """
    KH = KW = int(kernel_size)
    stride = int(stride)
    pad = int(padding)
    w1, b1, g1, be1, w2, b2, g2, be2 = params
    Cout = w1.shape[0]
    B, Cin, H, W = x.shape

    Hp, Wp = H + 2 * pad, W + 2 * pad
    OH = (Hp - KH) // stride + 1
    OW = (Wp - KW) // stride + 1
    qi, qj = (KH - 1) // stride, (KW - 1) // stride   # per-axis tap phase span
    PH, PW = OH + qi, OW + qj                         # per-phase spatial extent
    S2 = stride * stride

    Cinp = _round_up(Cin, 8)
    if cout_chunk:
        chunk = _round_up(min(int(cout_chunk), Cout), 8)
    else:
        chunk = min(_round_up(Cout, 8), 128)
    NC = -(-Cout // chunk)            # number of channel chunks
    NCc = NC * chunk
    C2 = 2 * chunk

    Lm = OH * PW                      # real (row-strided) matmul columns
    Lmp = _round_up(Lm, 128)          # lane-dense matmul / store width
    max_off = qi * PW + qj
    Ltot = _round_up(max_off + Lmp, 128)

    # --- stride-phase split of the padded input (layout only, no expansion) --
    x2 = jnp.pad(x, ((0, 0), (0, 0),
                     (pad, stride * PH - H - pad),
                     (pad, stride * PW - W - pad)))
    xs = x2.reshape(B, Cin, PH, stride, PW, stride).transpose(0, 3, 5, 1, 2, 4)
    xs = xs.reshape(B, S2, Cin, PH * PW)
    xs = jnp.pad(xs, ((0, 0), (0, 0), (0, Cinp - Cin), (0, Ltot - PH * PW)))
    xs = xs.reshape(B, S2 * Cinp, Ltot).astype(compute_dtype)

    # --- weights: per-tap (2*chunk, Cinp) blocks, main+gate fused along M ----
    def pad_w(w):
        return jnp.pad(w, ((0, NCc - Cout), (0, Cinp - Cin), (0, 0), (0, 0)))
    wg = jnp.concatenate([pad_w(w1).reshape(NC, chunk, Cinp, KH, KW),
                          pad_w(w2).reshape(NC, chunk, Cinp, KH, KW)], axis=1)
    w_all = (wg.transpose(0, 3, 4, 1, 2)             # (NC, KH, KW, 2C, Cinp)
               .reshape(NC, KH * KW * C2, Cinp)
               .astype(compute_dtype))

    # --- per-channel params packed: [bias | gamma | beta] (one small DMA) ----
    def pad_v(v1, v2):
        a = jnp.pad(v1, (0, NCc - Cout)).reshape(NC, chunk)
        b = jnp.pad(v2, (0, NCc - Cout)).reshape(NC, chunk)
        return jnp.concatenate([a, b], axis=1)
    pb = jnp.stack([pad_v(b1, b2), pad_v(g1, g2), pad_v(be1, be2)],
                   axis=2).astype(jnp.float32)        # (NC, 2C, 3)

    # --- lane-validity mask: real output columns are ow < OW in each PW row --
    mask_np = np.zeros((1, Lmp), np.float32)
    for oh in range(OH):
        mask_np[0, oh * PW: oh * PW + OW] = 1.0
    mask = jnp.asarray(mask_np)

    # --- VMEM budget (operand blocks x2 + f32 intermediates), clamp to HW ----
    isz = jnp.dtype(compute_dtype).itemsize
    blk = (S2 * Cinp * Ltot * isz            # input phase block
           + KH * KW * C2 * Cinp * isz       # fused weight block
           + C2 * 128 * 4                    # packed params (tile-padded)
           + 8 * Lmp * 4                     # mask (tile-padded)
           + chunk * Lmp * 4)                # output block
    interm = 6 * C2 * Lmp * 4                # h / centered / n / sigmoid temps
    need = 2 * blk + interm
    vmem_limit = int(min(max(int(need * 1.5), 32 * 1024 * 1024),
                         _physical_vmem_bytes()))

    kernel = _make_kernel(KH, KW, stride, PW, Lmp, Cinp, chunk, OH * OW, EPS)
    out = pl.pallas_call(
        kernel,
        out_shape=jax.ShapeDtypeStruct((B, NCc, Lmp), jnp.float32),
        grid_spec=pltpu.PrefetchScalarGridSpec(
            num_scalar_prefetch=0,
            grid=(B, NC),
            in_specs=[
                pl.BlockSpec((1, S2 * Cinp, Ltot), lambda b, c: (b, 0, 0)),
                pl.BlockSpec((1, KH * KW * C2, Cinp), lambda b, c: (c, 0, 0)),
                pl.BlockSpec((1, C2, 3), lambda b, c: (c, 0, 0)),
                pl.BlockSpec((1, Lmp), lambda b, c: (0, 0)),
            ],
            out_specs=pl.BlockSpec((1, chunk, Lmp), lambda b, c: (b, c, 0)),
        ),
        compiler_params=pltpu.CompilerParams(
            dimension_semantics=("parallel", "parallel"),
            vmem_limit_bytes=vmem_limit),
    )(xs, w_all, pb, mask)

    # (B, NCc, Lmp): keep real channels, drop junk lanes, un-flatten spatial.
    y = out[:, :Cout, :Lm].reshape(B, Cout, OH, PW)[:, :, :, :OW]
    return y


# --------------------------------------------------------------------------
# Pure-JAX reference (for the sanity check)
# --------------------------------------------------------------------------
def _reference(x, params, kernel_size, stride, padding):
    w1, b1, g1, be1, w2, b2, g2, be2 = params

    def branch(w, b, g, be):
        y = jax.lax.conv_general_dilated(
            x, w, window_strides=(stride, stride),
            padding=[(padding, padding), (padding, padding)],
            dimension_numbers=("NCHW", "OIHW", "NCHW"))
        y = y + b[None, :, None, None]
        m = jnp.mean(y, axis=(2, 3), keepdims=True)
        v = jnp.mean(jnp.square(y - m), axis=(2, 3), keepdims=True)
        yn = (y - m) * jax.lax.rsqrt(v + EPS)
        return yn * g[None, :, None, None] + be[None, :, None, None]

    a = branch(w1, b1, g1, be1)
    gte = branch(w2, b2, g2, be2)
    return a * jax.nn.sigmoid(gte)


def _make_params(keys, cout, cin, ksz):
    return (
        0.1 * jax.random.normal(keys[0], (cout, cin, ksz, ksz), jnp.float32),
        0.1 * jax.random.normal(keys[1], (cout,), jnp.float32),
        1.0 + 0.1 * jax.random.normal(keys[2], (cout,), jnp.float32),
        0.1 * jax.random.normal(keys[3], (cout,), jnp.float32),
        0.1 * jax.random.normal(keys[4], (cout, cin, ksz, ksz), jnp.float32),
        0.1 * jax.random.normal(keys[5], (cout,), jnp.float32),
        1.0 + 0.1 * jax.random.normal(keys[6], (cout,), jnp.float32),
        0.1 * jax.random.normal(keys[7], (cout,), jnp.float32),
    )


if __name__ == "__main__":
    ks = jax.random.split(jax.random.PRNGKey(0), 20)

    # ---- Test 1: nominal small config (single channel chunk) ---------------
    B, Cin, H, W = 2, 4, 16, 16
    Cout, ksz, stride, pad = 8, 3, 2, 1
    x = jax.random.normal(ks[0], (B, Cin, H, W), jnp.float32)
    params = _make_params(ks[1:9], Cout, Cin, ksz)
    ref = _reference(x, params, ksz, stride, pad)

    # Exact-semantics check with f32 matmul operands.
    out_f32 = downsample_generator(x, params, ksz, stride, pad,
                                   compute_dtype=jnp.float32)
    jax.block_until_ready(out_f32)
    assert out_f32.shape == (B, Cout, 8, 8), out_f32.shape
    assert jnp.allclose(out_f32, ref, atol=1e-4, rtol=1e-4), "f32 mismatch"

    # Default path: bf16 MXU operands, f32 accumulation.
    out_bf16 = downsample_generator(x, params, ksz, stride, pad)
    jax.block_until_ready(out_bf16)
    assert out_bf16.shape == (B, Cout, 8, 8), out_bf16.shape
    assert jnp.allclose(out_bf16, ref, atol=1e-1, rtol=1e-1), "bf16 mismatch"

    # ---- Test 2: exercise the channel-chunk grid path (2 chunks) -----------
    B2, Cin2, H2, W2, Cout2 = 1, 3, 12, 12, 16
    x2 = jax.random.normal(ks[10], (B2, Cin2, H2, W2), jnp.float32)
    params2 = _make_params(ks[11:19], Cout2, Cin2, 3)
    ref2 = _reference(x2, params2, 3, 2, 1)
    out2 = downsample_generator(x2, params2, 3, 2, 1,
                                compute_dtype=jnp.float32, cout_chunk=8)
    jax.block_until_ready(out2)
    assert out2.shape == (B2, Cout2, 6, 6), out2.shape
    assert jnp.allclose(out2, ref2, atol=1e-4, rtol=1e-4), "chunked mismatch"

    print("KERNEL_OK")
</pallas_src>

<mosaic_0001>
module attributes {stable_mosaic.version = 11 : i64} {
  func.func @kernel(%arg0: i32, %arg1: i32, %arg2: memref<1x32x256xf32, #tpu.memory_space<vmem>>, %arg3: memref<1x144x8xf32, #tpu.memory_space<vmem>>, %arg4: memref<1x16x3xf32, #tpu.memory_space<vmem>>, %arg5: memref<1x128xf32, #tpu.memory_space<vmem>>, %arg6: memref<1x8x128xf32, #tpu.memory_space<vmem>>) attributes {dimension_semantics = [#tpu.dimension_semantics<parallel>, #tpu.dimension_semantics<parallel>], iteration_bounds = array<i64: 2, 1>, scalar_prefetch = 0 : i64, scratch_operands = 0 : i64, tpu.core_type = #tpu.core_type<tc>, window_params = [{transform_indices = @transform_0, window_bounds = array<i64: 1, 32, 256>}, {transform_indices = @transform_1, window_bounds = array<i64: 1, 144, 8>}, {transform_indices = @transform_2, window_bounds = array<i64: 1, 16, 3>}, {pipeline_mode = #tpu.pipeline_mode<synchronous>, transform_indices = @transform_3, window_bounds = array<i64: 1, 128>}, {transform_indices = @transform_4, window_bounds = array<i64: 1, 8, 128>}]} {
    %cst = arith.constant 0.000000e+00 : f32
    %0 = vector.broadcast %cst : f32 to vector<16x128xf32>
    %c0 = arith.constant 0 : index
    %c0_0 = arith.constant 0 : index
    %c0_1 = arith.constant 0 : index
    %1 = vector.load %arg2[%c0, %c0_0, %c0_1] : memref<1x32x256xf32, #tpu.memory_space<vmem>>, vector<1x8x128xf32>
    %2 = vector.shape_cast %1 : vector<1x8x128xf32> to vector<8x128xf32>
    %c0_2 = arith.constant 0 : index
    %c0_3 = arith.constant 0 : index
    %c0_4 = arith.constant 0 : index
    %3 = vector.load %arg3[%c0_2, %c0_3, %c0_4] : memref<1x144x8xf32, #tpu.memory_space<vmem>>, vector<1x16x8xf32>
    %4 = vector.shape_cast %3 : vector<1x16x8xf32> to vector<16x8xf32>
    %cst_5 = arith.constant dense<0.000000e+00> : vector<16x128xf32>
    %5 = tpu.matmul %4, %2, %cst_5 {dimension_numbers = #tpu.dot_dimension_numbers<[1], [0], [0], [1], [0, 0, 1, 1], [], []>} : vector<16x8xf32>, vector<8x128xf32>, vector<16x128xf32> -> vector<16x128xf32>
    %6 = arith.addf %0, %5 : vector<16x128xf32>
    %c0_6 = arith.constant 0 : index
    %c8 = arith.constant 8 : index
    %c0_7 = arith.constant 0 : index
    %7 = vector.load %arg2[%c0_6, %c8, %c0_7] : memref<1x32x256xf32, #tpu.memory_space<vmem>>, vector<1x8x128xf32>
    %8 = vector.shape_cast %7 : vector<1x8x128xf32> to vector<8x128xf32>
    %c0_8 = arith.constant 0 : index
    %c16 = arith.constant 16 : index
    %c0_9 = arith.constant 0 : index
    %9 = vector.load %arg3[%c0_8, %c16, %c0_9] : memref<1x144x8xf32, #tpu.memory_space<vmem>>, vector<1x16x8xf32>
    %10 = vector.shape_cast %9 : vector<1x16x8xf32> to vector<16x8xf32>
    %cst_10 = arith.constant dense<0.000000e+00> : vector<16x128xf32>
    %11 = tpu.matmul %10, %8, %cst_10 {dimension_numbers = #tpu.dot_dimension_numbers<[1], [0], [0], [1], [0, 0, 1, 1], [], []>} : vector<16x8xf32>, vector<8x128xf32>, vector<16x128xf32> -> vector<16x128xf32>
    %12 = arith.addf %6, %11 : vector<16x128xf32>
    %c0_11 = arith.constant 0 : index
    %c0_12 = arith.constant 0 : index
    %c1 = arith.constant 1 : index
    %13 = vector.load %arg2[%c0_11, %c0_12, %c1] : memref<1x32x256xf32, #tpu.memory_space<vmem>>, vector<1x8x128xf32>
    %14 = vector.shape_cast %13 : vector<1x8x128xf32> to vector<8x128xf32>
    %c0_13 = arith.constant 0 : index
    %c32 = arith.constant 32 : index
    %c0_14 = arith.constant 0 : index
    %15 = vector.load %arg3[%c0_13, %c32, %c0_14] : memref<1x144x8xf32, #tpu.memory_space<vmem>>, vector<1x16x8xf32>
    %16 = vector.shape_cast %15 : vector<1x16x8xf32> to vector<16x8xf32>
    %cst_15 = arith.constant dense<0.000000e+00> : vector<16x128xf32>
    %17 = tpu.matmul %16, %14, %cst_15 {dimension_numbers = #tpu.dot_dimension_numbers<[1], [0], [0], [1], [0, 0, 1, 1], [], []>} : vector<16x8xf32>, vector<8x128xf32>, vector<16x128xf32> -> vector<16x128xf32>
    %18 = arith.addf %12, %17 : vector<16x128xf32>
    %c0_16 = arith.constant 0 : index
    %c16_17 = arith.constant 16 : index
    %c0_18 = arith.constant 0 : index
    %19 = vector.load %arg2[%c0_16, %c16_17, %c0_18] : memref<1x32x256xf32, #tpu.memory_space<vmem>>, vector<1x8x128xf32>
    %20 = vector.shape_cast %19 : vector<1x8x128xf32> to vector<8x128xf32>
    %c0_19 = arith.constant 0 : index
    %c48 = arith.constant 48 : index
    %c0_20 = arith.constant 0 : index
    %21 = vector.load %arg3[%c0_19, %c48, %c0_20] : memref<1x144x8xf32, #tpu.memory_space<vmem>>, vector<1x16x8xf32>
    %22 = vector.shape_cast %21 : vector<1x16x8xf32> to vector<16x8xf32>
    %cst_21 = arith.constant dense<0.000000e+00> : vector<16x128xf32>
    %23 = tpu.matmul %22, %20, %cst_21 {dimension_numbers = #tpu.dot_dimension_numbers<[1], [0], [0], [1], [0, 0, 1, 1], [], []>} : vector<16x8xf32>, vector<8x128xf32>, vector<16x128xf32> -> vector<16x128xf32>
    %24 = arith.addf %18, %23 : vector<16x128xf32>
    %c0_22 = arith.constant 0 : index
    %c24 = arith.constant 24 : index
    %c0_23 = arith.constant 0 : index
    %25 = vector.load %arg2[%c0_22, %c24, %c0_23] : memref<1x32x256xf32, #tpu.memory_space<vmem>>, vector<1x8x128xf32>
    %26 = vector.shape_cast %25 : vector<1x8x128xf32> to vector<8x128xf32>
    %c0_24 = arith.constant 0 : index
    %c64 = arith.constant 64 : index
    %c0_25 = arith.constant 0 : index
    %27 = vector.load %arg3[%c0_24, %c64, %c0_25] : memref<1x144x8xf32, #tpu.memory_space<vmem>>, vector<1x16x8xf32>
    %28 = vector.shape_cast %27 : vector<1x16x8xf32> to vector<16x8xf32>
    %cst_26 = arith.constant dense<0.000000e+00> : vector<16x128xf32>
    %29 = tpu.matmul %28, %26, %cst_26 {dimension_numbers = #tpu.dot_dimension_numbers<[1], [0], [0], [1], [0, 0, 1, 1], [], []>} : vector<16x8xf32>, vector<8x128xf32>, vector<16x128xf32> -> vector<16x128xf32>
    %30 = arith.addf %24, %29 : vector<16x128xf32>
    %c0_27 = arith.constant 0 : index
    %c16_28 = arith.constant 16 : index
    %c1_29 = arith.constant 1 : index
    %31 = vector.load %arg2[%c0_27, %c16_28, %c1_29] : memref<1x32x256xf32, #tpu.memory_space<vmem>>, vector<1x8x128xf32>
    %32 = vector.shape_cast %31 : vector<1x8x128xf32> to vector<8x128xf32>
    %c0_30 = arith.constant 0 : index
    %c80 = arith.constant 80 : index
    %c0_31 = arith.constant 0 : index
    %33 = vector.load %arg3[%c0_30, %c80, %c0_31] : memref<1x144x8xf32, #tpu.memory_space<vmem>>, vector<1x16x8xf32>
    %34 = vector.shape_cast %33 : vector<1x16x8xf32> to vector<16x8xf32>
    %cst_32 = arith.constant dense<0.000000e+00> : vector<16x128xf32>
    %35 = tpu.matmul %34, %32, %cst_32 {dimension_numbers = #tpu.dot_dimension_numbers<[1], [0], [0], [1], [0, 0, 1, 1], [], []>} : vector<16x8xf32>, vector<8x128xf32>, vector<16x128xf32> -> vector<16x128xf32>
    %36 = arith.addf %30, %35 : vector<16x128xf32>
    %c0_33 = arith.constant 0 : index
    %c0_34 = arith.constant 0 : index
    %c9 = arith.constant 9 : index
    %37 = vector.load %arg2[%c0_33, %c0_34, %c9] : memref<1x32x256xf32, #tpu.memory_space<vmem>>, vector<1x8x128xf32>
    %38 = vector.shape_cast %37 : vector<1x8x128xf32> to vector<8x128xf32>
    %c0_35 = arith.constant 0 : index
    %c96 = arith.constant 96 : index
    %c0_36 = arith.constant 0 : index
    %39 = vector.load %arg3[%c0_35, %c96, %c0_36] : memref<1x144x8xf32, #tpu.memory_space<vmem>>, vector<1x16x8xf32>
    %40 = vector.shape_cast %39 : vector<1x16x8xf32> to vector<16x8xf32>
    %cst_37 = arith.constant dense<0.000000e+00> : vector<16x128xf32>
    %41 = tpu.matmul %40, %38, %cst_37 {dimension_numbers = #tpu.dot_dimension_numbers<[1], [0], [0], [1], [0, 0, 1, 1], [], []>} : vector<16x8xf32>, vector<8x128xf32>, vector<16x128xf32> -> vector<16x128xf32>
    %42 = arith.addf %36, %41 : vector<16x128xf32>
    %c0_38 = arith.constant 0 : index
    %c8_39 = arith.constant 8 : index
    %c9_40 = arith.constant 9 : index
    %43 = vector.load %arg2[%c0_38, %c8_39, %c9_40] : memref<1x32x256xf32, #tpu.memory_space<vmem>>, vector<1x8x128xf32>
    %44 = vector.shape_cast %43 : vector<1x8x128xf32> to vector<8x128xf32>
    %c0_41 = arith.constant 0 : index
    %c112 = arith.constant 112 : index
    %c0_42 = arith.constant 0 : index
    %45 = vector.load %arg3[%c0_41, %c112, %c0_42] : memref<1x144x8xf32, #tpu.memory_space<vmem>>, vector<1x16x8xf32>
    %46 = vector.shape_cast %45 : vector<1x16x8xf32> to vector<16x8xf32>
    %cst_43 = arith.constant dense<0.000000e+00> : vector<16x128xf32>
    %47 = tpu.matmul %46, %44, %cst_43 {dimension_numbers = #tpu.dot_dimension_numbers<[1], [0], [0], [1], [0, 0, 1, 1], [], []>} : vector<16x8xf32>, vector<8x128xf32>, vector<16x128xf32> -> vector<16x128xf32>
    %48 = arith.addf %42, %47 : vector<16x128xf32>
    %c0_44 = arith.constant 0 : index
    %c0_45 = arith.constant 0 : index
    %c10 = arith.constant 10 : index
    %49 = vector.load %arg2[%c0_44, %c0_45, %c10] : memref<1x32x256xf32, #tpu.memory_space<vmem>>, vector<1x8x128xf32>
    %50 = vector.shape_cast %49 : vector<1x8x128xf32> to vector<8x128xf32>
    %c0_46 = arith.constant 0 : index
    %c128 = arith.constant 128 : index
    %c0_47 = arith.constant 0 : index
    %51 = vector.load %arg3[%c0_46, %c128, %c0_47] : memref<1x144x8xf32, #tpu.memory_space<vmem>>, vector<1x16x8xf32>
    %52 = vector.shape_cast %51 : vector<1x16x8xf32> to vector<16x8xf32>
    %cst_48 = arith.constant dense<0.000000e+00> : vector<16x128xf32>
    %53 = tpu.matmul %52, %50, %cst_48 {dimension_numbers = #tpu.dot_dimension_numbers<[1], [0], [0], [1], [0, 0, 1, 1], [], []>} : vector<16x8xf32>, vector<8x128xf32>, vector<16x128xf32> -> vector<16x128xf32>
    %54 = arith.addf %48, %53 : vector<16x128xf32>
    %c0_49 = arith.constant 0 : index
    %c0_50 = arith.constant 0 : index
    %c0_51 = arith.constant 0 : index
    %55 = vector.load %arg4[%c0_49, %c0_50, %c0_51] : memref<1x16x3xf32, #tpu.memory_space<vmem>>, vector<1x16x3xf32>
    %56 = vector.shape_cast %55 : vector<1x16x3xf32> to vector<16x3xf32>
    %57 = vector.extract_strided_slice %56 {offsets = [0, 0], sizes = [16, 1], strides = [1, 1]} : vector<16x3xf32> to vector<16x1xf32>
    %58 = vector.broadcast %57 : vector<16x1xf32> to vector<16x128xf32>
    %59 = arith.addf %54, %58 : vector<16x128xf32>
    %c0_52 = arith.constant 0 : index
    %c0_53 = arith.constant 0 : index
    %60 = vector.load %arg5[%c0_52, %c0_53] : memref<1x128xf32, #tpu.memory_space<vmem>>, vector<1x128xf32>
    %61 = vector.broadcast %60 : vector<1x128xf32> to vector<16x128xf32>
    %62 = arith.mulf %59, %61 : vector<16x128xf32>
    %cst_54 = arith.constant dense<0.000000e+00> : vector<16xf32>
    %63 = vector.multi_reduction <add>, %62, %cst_54 [1] : vector<16x128xf32> to vector<16xf32>
    %64 = vector.shape_cast %63 : vector<16xf32> to vector<16x1xf32>
    %cst_55 = arith.constant 1.562500e-02 : f32
    %65 = vector.broadcast %cst_55 : f32 to vector<16x1xf32>
    %66 = arith.mulf %64, %65 : vector<16x1xf32>
    %67 = vector.broadcast %66 : vector<16x1xf32> to vector<16x128xf32>
    %68 = arith.subf %59, %67 : vector<16x128xf32>
    %69 = vector.broadcast %60 : vector<1x128xf32> to vector<16x128xf32>
    %70 = arith.mulf %68, %69 : vector<16x128xf32>
    %71 = arith.mulf %70, %70 : vector<16x128xf32>
    %cst_56 = arith.constant dense<0.000000e+00> : vector<16xf32>
    %72 = vector.multi_reduction <add>, %71, %cst_56 [1] : vector<16x128xf32> to vector<16xf32>
    %73 = vector.shape_cast %72 : vector<16xf32> to vector<16x1xf32>
    %cst_57 = arith.constant 1.562500e-02 : f32
    %74 = vector.broadcast %cst_57 : f32 to vector<16x1xf32>
    %75 = arith.mulf %73, %74 : vector<16x1xf32>
    %76 = vector.extract_strided_slice %56 {offsets = [0, 1], sizes = [16, 1], strides = [1, 1]} : vector<16x3xf32> to vector<16x1xf32>
    %cst_58 = arith.constant 9.99999974E-6 : f32
    %77 = vector.broadcast %cst_58 : f32 to vector<16x1xf32>
    %78 = arith.addf %75, %77 : vector<16x1xf32>
    %79 = math.rsqrt %78 : vector<16x1xf32>
    %80 = arith.mulf %76, %79 : vector<16x1xf32>
    %81 = vector.extract_strided_slice %56 {offsets = [0, 2], sizes = [16, 1], strides = [1, 1]} : vector<16x3xf32> to vector<16x1xf32>
    %82 = arith.mulf %80, %66 : vector<16x1xf32>
    %83 = arith.subf %81, %82 : vector<16x1xf32>
    %84 = vector.broadcast %80 : vector<16x1xf32> to vector<16x128xf32>
    %85 = arith.mulf %59, %84 : vector<16x128xf32>
    %86 = vector.broadcast %83 : vector<16x1xf32> to vector<16x128xf32>
    %87 = arith.addf %85, %86 : vector<16x128xf32>
    %88 = vector.extract_strided_slice %87 {offsets = [0, 0], sizes = [8, 128], strides = [1, 1]} : vector<16x128xf32> to vector<8x128xf32>
    %89 = vector.extract_strided_slice %87 {offsets = [8, 0], sizes = [8, 128], strides = [1, 1]} : vector<16x128xf32> to vector<8x128xf32>
    %90 = arith.negf %89 : vector<8x128xf32>
    %91 = math.exp %90 : vector<8x128xf32>
    %cst_59 = arith.constant 1.000000e+00 : f32
    %92 = vector.broadcast %cst_59 : f32 to vector<8x128xf32>
    %93 = arith.addf %92, %91 : vector<8x128xf32>
    %94 = arith.divf %92, %93 : vector<8x128xf32>
    %95 = arith.mulf %88, %94 : vector<8x128xf32>
    %c0_60 = arith.constant 0 : index
    %c0_61 = arith.constant 0 : index
    %c0_62 = arith.constant 0 : index
    %96 = vector.load %arg6[%c0_60, %c0_61, %c0_62] : memref<1x8x128xf32, #tpu.memory_space<vmem>>, vector<1x8x128xf32>
    %97 = vector.shape_cast %96 : vector<1x8x128xf32> to vector<8x128xf32>
    %98 = vector.shape_cast %95 : vector<8x128xf32> to vector<1x8x128xf32>
    tpu.vector_store %arg6[%c0_60, %c0_61, %c0_62], %98 {strides = array<i32>} : memref<1x8x128xf32, #tpu.memory_space<vmem>>, vector<1x8x128xf32>,
    return
  }
  func.func @transform_0(%arg0: i32, %arg1: i32) -> (i32, i32, i32) {
    %c0_i32 = arith.constant 0 : i32
    %c0_i32_0 = arith.constant 0 : i32
    %c0_i32_1 = arith.constant 0 : i32
    return %arg0, %c0_i32, %c0_i32_0 : i32, i32, i32
  }
  func.func @transform_1(%arg0: i32, %arg1: i32) -> (i32, i32, i32) {
    %c0_i32 = arith.constant 0 : i32
    %c0_i32_0 = arith.constant 0 : i32
    %c0_i32_1 = arith.constant 0 : i32
    return %arg1, %c0_i32, %c0_i32_0 : i32, i32, i32
  }
  func.func @transform_2(%arg0: i32, %arg1: i32) -> (i32, i32, i32) {
    %c0_i32 = arith.constant 0 : i32
    %c0_i32_0 = arith.constant 0 : i32
    %c0_i32_1 = arith.constant 0 : i32
    return %arg1, %c0_i32, %c0_i32_0 : i32, i32, i32
  }
  func.func @transform_3(%arg0: i32, %arg1: i32) -> (i32, i32) {
    %c0_i32 = arith.constant 0 : i32
    %c0_i32_0 = arith.constant 0 : i32
    %c0_i32_1 = arith.constant 0 : i32
    return %c0_i32, %c0_i32_0 : i32, i32
  }
  func.func @transform_4(%arg0: i32, %arg1: i32) -> (i32, i32, i32) {
    %c0_i32 = arith.constant 0 : i32
    %c0_i32_0 = arith.constant 0 : i32
    return %arg0, %arg1, %c0_i32 : i32, i32, i32
  }
}

</mosaic_0001>

<llo_original>
// kernel: tpu_custom_call.1
$region0: #{tpu_custom_call.1}
  #allocation0 [shape = 'u32[]', space=smem, size = 0x4, offset = 0x4, fixed_abs, tag = 'smem constant byte address 0x4 - core index']
  #allocation1 [shape = 'u32[144,128]{1,0:T(1,128)}', space=vmem, size = 0x12000, scoped, tag = 'internal scratch']
  %s0 = inlined_call_operand.vmem [shape: f32[2,32,256], index: 0, kind: input, shape index: {}]
  %s1 = inlined_call_operand.vmem [shape: f32[1,144,8], index: 1, kind: input, shape index: {}]
  %s2 = inlined_call_operand.vmem [shape: f32[1,16,3], index: 2, kind: input, shape index: {}]
  %s3 = inlined_call_operand.vmem [shape: f32[1,128], index: 3, kind: input, shape index: {}]
  %s4 = inlined_call_operand.hbm [shape: f32[2,8,128], index: 4, kind: output, shape index: {}]
  %s5 = sld [smem:[#allocation0]]
  $region49: #{tpu_custom_call.1} parent=0
    _
  %s7 = ssub.s32 1, %s5
  %s8 = scalar_select 0, %s7, %s5
  $region1: #{tpu_custom_call.1} parent=0
    #allocation2 [shape = 'u8[8192]{0}', space=vmem, size = 0x2000, scoped, tag = 'output window, operand 0']
    #allocation3 [shape = 's32[2]{0}', space=sflag, size = 0x8, scoped, tag = 'scoped memory for tpu_custom_call.1']
    %9 = vsyncpa [#allocation3], 0
    %s10 = scalar_lea.sflag [#allocation3], 1
    %11 = vsyncpa %s10, 0
    loop: start=0, step=1, limit=4
    $region2: #{tpu_custom_call.1} parent=1 // loop_pre_header
      _
    $region3: #{tpu_custom_call.1} parent=1 // loop_header
      %s13 = sphi 0, %s17
      %p14 = scmp.ge.s32.totalorder %s13, 4
      %s20 = sphi 0, %s32
      %s21 = sphi 0, %s28
      %s22 = sphi 0, %s20
      %s23 = sphi 0, %s21
      %s24 = sphi 0, %s22
      %s25 = sphi 0, %s23
      %s35 = sphi 0, %s37
      %s38 = sphi 0, %s35
      %s39 = sphi 0, %s38
      %s55 = sphi 0, %s39
      %s61 = sphi 0, %s63
      %s64 = sphi 0, %s61
      %s65 = sphi 0, %s64
      %s81 = sphi 0, %s65
      %s87 = sphi 0, %s89
      %s90 = sphi 0, %s87
      %s91 = sphi 0, %s90
      %s107 = sphi 0, %s91
      %s111 = sphi 0, %s111
      %s113 = sphi 0, %s111
      %s114 = sphi 0, %s113
      %s128 = sphi 0, %s114
      %s136 = sphi 0, %s138
      %s139 = sphi 0, %s136
      %s140 = sphi 0, %s139
      %s156 = sphi 0, %s140
    $region4: #{tpu_custom_call.1} parent=1 // loop_header_branch
      %16 = sbr.rel (%p14) target = $region8
    $region5: #{tpu_custom_call.1} parent=1 // loop_body
      %s18 = ssub.s32 %s13, 1
      %s19 = ssub.s32 %s13, 2
      %s26 = sadd.s32 1, %s21
      %p27 = scmp.ge.s32.totalorder %s26, 1
      %s28 = scalar_select %p27, 0, %s26
      %s29 = sadd.s32 1, %s20
      %s30 = scalar_select %p27, %s29, %s20
      %p31 = scmp.ge.s32.totalorder %s30, 2
      %s32 = scalar_select %p31, 0, %s30
      %s33 = ssub.s32 %s20, %s32
      %p34 = scmp.eq.s32.totalorder %s33, 0
      %s36 = sadd.s32 %s35, 1
      %s37 = scalar_select %p34, %s35, %s36
      %p40 = pneg %p34
      %p41 = scmp.eq.s32.totalorder %s13, 1
      %p42 = por %p40, %p41
      %p43 = scmp.ne.s32.totalorder %s35, %s38
      %p44 = scmp.eq.s32.totalorder %s13, 0
      %p45 = por %p43, %p44
      %p46 = scmp.ne.s32.totalorder %s35, %s38
      %p47 = scmp.eq.s32.totalorder %s18, 1
      %p48 = por %p46, %p47
      %p49 = scmp.ne.s32.totalorder %s38, %s39
      %p50 = scmp.eq.s32.totalorder %s18, 0
      %p51 = por %p49, %p50
      %p52 = scmp.ne.s32.totalorder %s38, %s39
      %p53 = scmp.eq.s32.totalorder %s19, 1
      %p54 = por %p52, %p53
      %p56 = scmp.ne.s32.totalorder %s39, %s55
      %p57 = scmp.eq.s32.totalorder %s19, 0
      %p58 = por %p56, %p57
      %s59 = ssub.s32 %s21, %s28
      %p60 = scmp.eq.s32.totalorder %s59, 0
      %s62 = sadd.s32 %s61, 1
      %s63 = scalar_select %p60, %s61, %s62
      %p66 = pneg %p60
      %p67 = scmp.eq.s32.totalorder %s13, 1
      %p68 = por %p66, %p67
      %p69 = scmp.ne.s32.totalorder %s61, %s64
      %p70 = scmp.eq.s32.totalorder %s13, 0
      %p71 = por %p69, %p70
      %p72 = scmp.ne.s32.totalorder %s61, %s64
      %p73 = scmp.eq.s32.totalorder %s18, 1
      %p74 = por %p72, %p73
      %p75 = scmp.ne.s32.totalorder %s64, %s65
      %p76 = scmp.eq.s32.totalorder %s18, 0
      %p77 = por %p75, %p76
      %p78 = scmp.ne.s32.totalorder %s64, %s65
      %p79 = scmp.eq.s32.totalorder %s19, 1
      %p80 = por %p78, %p79
      %p82 = scmp.ne.s32.totalorder %s65, %s81
      %p83 = scmp.eq.s32.totalorder %s19, 0
      %p84 = por %p82, %p83
      %s85 = ssub.s32 %s21, %s28
      %p86 = scmp.eq.s32.totalorder %s85, 0
      %s88 = sadd.s32 %s87, 1
      %s89 = scalar_select %p86, %s87, %s88
      %p92 = pneg %p86
      %p93 = scmp.eq.s32.totalorder %s13, 1
      %p94 = por %p92, %p93
      %p95 = scmp.ne.s32.totalorder %s87, %s90
      %p96 = scmp.eq.s32.totalorder %s13, 0
      %p97 = por %p95, %p96
      %p98 = scmp.ne.s32.totalorder %s87, %s90
      %p99 = scmp.eq.s32.totalorder %s18, 1
      %p100 = por %p98, %p99
      %p101 = scmp.ne.s32.totalorder %s90, %s91
      %p102 = scmp.eq.s32.totalorder %s18, 0
      %p103 = por %p101, %p102
      %p104 = scmp.ne.s32.totalorder %s90, %s91
      %p105 = scmp.eq.s32.totalorder %s19, 1
      %p106 = por %p104, %p105
      %p108 = scmp.ne.s32.totalorder %s91, %s107
      %p109 = scmp.eq.s32.totalorder %s19, 0
      %p110 = por %p108, %p109
      %s112 = sadd.s32 %s111, 1
      %p115 = scmp.eq.s32.totalorder %s13, 1
      %p116 = scmp.ne.s32.totalorder %s111, %s113
      %p117 = scmp.eq.s32.totalorder %s13, 0
      %p118 = por %p116, %p117
      %p119 = scmp.ne.s32.totalorder %s111, %s113
      %p120 = scmp.eq.s32.totalorder %s18, 1
      %p121 = por %p119, %p120
      %p122 = scmp.ne.s32.totalorder %s113, %s114
      %p123 = scmp.eq.s32.totalorder %s18, 0
      %p124 = por %p122, %p123
      %p125 = scmp.ne.s32.totalorder %s113, %s114
      %p126 = scmp.eq.s32.totalorder %s19, 1
      %p127 = por %p125, %p126
      %p129 = scmp.ne.s32.totalorder %s114, %s128
      %p130 = scmp.eq.s32.totalorder %s19, 0
      %p131 = por %p129, %p130
      %s132 = ssub.s32 %s20, %s32
      %s133 = ssub.s32 %s21, %s28
      %s134 = sor.u32 %s132, %s133
      %p135 = scmp.eq.s32.totalorder %s134, 0
      %s137 = sadd.s32 %s136, 1
      %s138 = scalar_select %p135, %s136, %s137
      %p141 = pneg %p135
      %p142 = scmp.eq.s32.totalorder %s13, 1
      %p143 = por %p141, %p142
      %p144 = scmp.ne.s32.totalorder %s136, %s139
      %p145 = scmp.eq.s32.totalorder %s13, 0
      %p146 = por %p144, %p145
      %p147 = scmp.ne.s32.totalorder %s136, %s139
      %p148 = scmp.eq.s32.totalorder %s18, 1
      %p149 = por %p147, %p148
      %p150 = scmp.ne.s32.totalorder %s139, %s140
      %p151 = scmp.eq.s32.totalorder %s18, 0
      %p152 = por %p150, %p151
      %p153 = scmp.ne.s32.totalorder %s139, %s140
      %p154 = scmp.eq.s32.totalorder %s19, 1
      %p155 = por %p153, %p154
      %p157 = scmp.ne.s32.totalorder %s140, %s156
      %p158 = scmp.eq.s32.totalorder %s19, 0
      %p159 = por %p157, %p158
      %p160 = scmp.le.s32.totalorder 1, %s13
      %p161 = scmp.lt.s32.totalorder %s13, 3
      %p162 = pnand %p160, %p161
      %p163 = pneg %p162
      // Predicated region
      $region9: #{tpu_custom_call.1} parent=5 // pred_check
        _
      $region10: #{tpu_custom_call.1} parent=5 // pred_check_branch
        %165 = sbr.rel (%p162) target = $region12
      $region11: #{tpu_custom_call.1} parent=5 // pred_region
        %s166 = ssub.s32 %s13, 1
        // Predicated region
        $region13: #{tpu_custom_call.1} parent=11 // pred_check
          %p167 = pneg %p77
        $region14: #{tpu_custom_call.1} parent=11 // pred_check_branch
          %169 = sbr.rel (%p167) target = $region16
        $region15: #{tpu_custom_call.1} parent=11 // pred_region
          %p170 = scmp.lt.s32.totalorder %s23, 0
          %s171 = scalar_select %p170, %s23, 0
          %s172 = smul.addr %s171, 18
          %s173 = smul.addr %s172, 8
          %s174 = scalar_lea.vmem %s1, %s173
        $region16: #{tpu_custom_call.1} parent=11 // pred_fallthru
          _
        // Predicated region
        $region17: #{tpu_custom_call.1} parent=11 // pred_check
          %p175 = pneg %p103
        $region18: #{tpu_custom_call.1} parent=11 // pred_check_branch
          %177 = sbr.rel (%p175) target = $region20
        $region19: #{tpu_custom_call.1} parent=11 // pred_region
          %p178 = scmp.lt.s32.totalorder %s23, 0
          %s179 = scalar_select %p178, %s23, 0
          %s180 = smul.addr %s179, 2
          %s181 = smul.addr %s180, 8
          %s182 = scalar_lea.vmem %s2, %s181
        $region20: #{tpu_custom_call.1} parent=11 // pred_fallthru
          _
        // Predicated region
        $region21: #{tpu_custom_call.1} parent=11 // pred_check
          %p183 = pneg %p124
        $region22: #{tpu_custom_call.1} parent=11 // pred_check_branch
          %185 = sbr.rel (%p183) target = $region24
        $region23: #{tpu_custom_call.1} parent=11 // pred_region
          _
        $region24: #{tpu_custom_call.1} parent=11 // pred_fallthru
          _
      $region12: #{tpu_custom_call.1} parent=5 // pred_fallthru
        _
      %p186 = scmp.lt.s32.totalorder %s13, 2
      // Predicated region
      $region25: #{tpu_custom_call.1} parent=5 // pred_check
        %p187 = pneg %p186
      $region26: #{tpu_custom_call.1} parent=5 // pred_check_branch
        %189 = sbr.rel (%p187) target = $region28
      $region27: #{tpu_custom_call.1} parent=5 // pred_region
        // Predicated region
        $region29: #{tpu_custom_call.1} parent=27 // pred_check
          %p190 = pneg %p45
        $region30: #{tpu_custom_call.1} parent=27 // pred_check_branch
          %192 = sbr.rel (%p190) target = $region32
        $region31: #{tpu_custom_call.1} parent=27 // pred_region
          %p193 = scmp.lt.s32.totalorder %s20, 1
          %s194 = scalar_select %p193, %s20, 1
          %s195 = smul.addr %s194, 8
          %s196 = smul.addr %s195, 8
          %s197 = scalar_lea.vmem %s0, %s196
        $region32: #{tpu_custom_call.1} parent=27 // pred_fallthru
          _
      $region28: #{tpu_custom_call.1} parent=5 // pred_fallthru
        _
      %p198 = scmp.le.s32.totalorder 1, %s13
      %p199 = scmp.lt.s32.totalorder %s13, 3
      %p200 = pnand %p198, %p199
      %p201 = pneg %p200
      // Predicated region
      $region33: #{tpu_custom_call.1} parent=5 // pred_check
        _
      $region34: #{tpu_custom_call.1} parent=5 // pred_check_branch
        %203 = sbr.rel (%p200) target = $region36
      $region35: #{tpu_custom_call.1} parent=5 // pred_region
        %s204 = ssub.s32 %s13, 1
        %p205 = scmp.lt.s32.totalorder %s22, 1
        %s206 = scalar_select %p205, %s22, 1
        %s207 = smul.addr %s206, 8
        %s208 = smul.addr %s207, 8
        %s209 = scalar_lea.vmem %s0, %s208
        %p210 = pneg %p51
        %p211 = pneg %p48
        %p212 = scmp.lt.s32.totalorder %s23, 0
        %s213 = scalar_select %p212, %s23, 0
        %s214 = smul.addr %s213, 18
        %s215 = smul.addr %s214, 8
        %s216 = scalar_lea.vmem %s1, %s215
        %p217 = pneg %p77
        %p218 = pneg %p74
        %p219 = scmp.lt.s32.totalorder %s23, 0
        %s220 = scalar_select %p219, %s23, 0
        %s221 = smul.addr %s220, 2
        %s222 = smul.addr %s221, 8
        %s223 = scalar_lea.vmem %s2, %s222
        %p224 = pneg %p103
        %p225 = pneg %p100
        %p226 = pneg %p124
        %p227 = pneg %p121
        %p228 = pneg %p152
        %p229 = pneg %p149
        %s230 = sand.u32 %s139, 1
        %s231 = scalar_lea.sflag [#allocation3], %s230
        %s232 = sand.u32 %s139, 1
        %s233 = smul.addr %s232, 8
        %s234 = scalar_lea.vmem [#allocation2], %s233
        %p235 = scmp.lt.s32.totalorder %s22, 1
        %s236 = scalar_select %p235, %s22, 1
        %s237 = smul.addr %s236, 8
        %s238 = smul.addr %s237, 8
        %s239 = scalar_lea.vmem %s0, %s238
        %p240 = scmp.lt.s32.totalorder %s23, 0
        %s241 = scalar_select %p240, %s23, 0
        %s242 = smul.addr %s241, 18
        %s243 = smul.addr %s242, 8
        %s244 = scalar_lea.vmem %s1, %s243
        %p245 = scmp.lt.s32.totalorder %s23, 0
        %s246 = scalar_select %p245, %s23, 0
        %s247 = smul.addr %s246, 2
        %s248 = smul.addr %s247, 8
        %s249 = scalar_lea.vmem %s2, %s248
        %v250 = vld [vmem:[%s239] sm:$0xff]
        %v251 = vld [vmem:[%s244] sm:$0xff]
        %v252 = vld [vmem:[%s244 + $0x8] sm:$0xff]
        %v253 = vld [vmem:[%s239 + $0x10] sm:$0xff]
        %v254 = vld [vmem:[%s244 + $0x10] sm:$0xff]
        %v255 = vld [vmem:[%s244 + $0x18] sm:$0xff]
        %vm256 = vcmask 64512
        %v258 = vsel %vm256, %v254, 0
        %v261 = vsel %vm256, %v255, 0
        %263 = vmatprep.subr.mxu0 0.0
        %264 = vmatpush1.msra.mxu0 %v253
        %265 = vmatprep.subr.mxu0 0.0
        %266 = vmatpush1.msra.mxu0 0.0
        %267 = vmatprep.subr.mxu0 0.0
        %268 = vmatpush1.msra.mxu0 0.0
        %269 = vmatprep.subr.mxu0 0.0
        %270 = vmatpush1.msra.mxu0 0.0
        %271 = vmatprep.subr.mxu0 0.0
        %272 = vmatpush1.msra.mxu0 0.0
        %273 = vmatprep.subr.mxu0 0.0
        %274 = vmatpush1.msra.mxu0 0.0
        %275 = vmatprep.subr.mxu0 0.0
        %276 = vmatpush1.msra.mxu0 0.0
        %277 = vmatprep.subr.mxu0 0.0
        %278 = vmatpush1.msra.mxu0 0.0
        %279 = vmatprep.subr.mxu0 0.0
        %280 = vmatpush1.msra.mxu0 0.0
        %281 = vmatprep.subr.mxu0 0.0
        %282 = vmatpush1.msra.mxu0 0.0
        %283 = vmatprep.subr.mxu0 0.0
        %284 = vmatpush1.msra.mxu0 0.0
        %285 = vmatprep.subr.mxu0 0.0
        %286 = vmatpush1.msra.mxu0 0.0
        %287 = vmatprep.subr.mxu0 0.0
        %288 = vmatpush1.msra.mxu0 0.0
        %289 = vmatprep.subr.mxu0 0.0
        %290 = vmatpush1.msra.mxu0 0.0
        %291 = vmatprep.subr.mxu0 0.0
        %292 = vmatpush1.msra.mxu0 0.0
        %293 = vmatprep.subr.mxu0 0.0
        %294 = vmatpush1.msra.mxu0 0.0
        %295 = vmatprep.subr.mxu0 0.0
        %296 = vmatpush1.msra.mxu0 0.0
        %297 = vmatprep.subr.mxu0 0.0
        %298 = vmatpush1.msra.mxu0 0.0
        %299 = vmatprep.subr.mxu0 0.0
        %300 = vmatpush1.msra.mxu0 0.0
        %301 = vmatprep.subr.mxu0 0.0
        %302 = vmatpush1.msra.mxu0 0.0
        %303 = vmatprep.subr.mxu0 0.0
        %304 = vmatpush1.msra.mxu0 0.0
        %305 = vmatprep.subr.mxu0 0.0
        %306 = vmatpush1.msra.mxu0 0.0
        %307 = vmatprep.subr.mxu0 0.0
        %308 = vmatpush1.msra.mxu0 0.0
        %309 = vmatprep.subr.mxu0 0.0
        %310 = vmatpush1.msra.mxu0 0.0
        %311 = vmatprep.subr.mxu0 0.0
        %312 = vmatpush1.msra.mxu0 0.0
        %313 = vmatprep.subr.mxu0 0.0
        %314 = vmatpush1.msra.mxu0 0.0
        %315 = vmatprep.subr.mxu0 0.0
        %316 = vmatpush1.msra.mxu0 0.0
        %317 = vmatprep.subr.mxu0 0.0
        %318 = vmatpush1.msra.mxu0 0.0
        %319 = vmatprep.subr.mxu0 0.0
        %320 = vmatpush1.msra.mxu0 0.0
        %321 = vmatprep.subr.mxu0 0.0
        %322 = vmatpush1.msra.mxu0 0.0
        %323 = vmatprep.subr.mxu0 0.0
        %324 = vmatpush1.msra.mxu0 0.0
        %325 = vmatprep.subr.mxu0 0.0
        %326 = vmatpush1.msra.mxu0 0.0
        %327 = vmatprep.mubr.f32.mxu0 0.0
        %328 = vmatmul.mubr.f32.gmra.mrb[0].mxu0 %v258
        %v329 = vpop.f32.mrb[0].mxu0
        %v330 = vadd.f32 0.0, %v329
        %v331 = vpop.f32.mrb[0].mxu0
        %332 = vmatprep.mubr.f32.mxu0 0.0
        %333 = vmatmul.mubr.f32.gmra.mrb[0].mxu0 %v261
        %v334 = vpop.f32.mrb[0].mxu0
        %v335 = vadd.f32 0.0, %v334
        %v336 = vpop.f32.mrb[0].mxu0
        %337 = vdwg.mxu0
        %v339 = vsel %vm256, %v251, 0
        %v342 = vsel %vm256, %v252, 0
        %344 = vmatprep.subr.mxu0 0.0
        %345 = vmatpush1.msra.mxu0 %v250
        %346 = vmatprep.subr.mxu0 0.0
        %347 = vmatpush1.msra.mxu0 0.0
        %348 = vmatprep.subr.mxu0 0.0
        %349 = vmatpush1.msra.mxu0 0.0
        %350 = vmatprep.subr.mxu0 0.0
        %351 = vmatpush1.msra.mxu0 0.0
        %352 = vmatprep.subr.mxu0 0.0
        %353 = vmatpush1.msra.mxu0 0.0
        %354 = vmatprep.subr.mxu0 0.0
        %355 = vmatpush1.msra.mxu0 0.0
        %356 = vmatprep.subr.mxu0 0.0
        %357 = vmatpush1.msra.mxu0 0.0
        %358 = vmatprep.subr.mxu0 0.0
        %359 = vmatpush1.msra.mxu0 0.0
        %360 = vmatprep.subr.mxu0 0.0
        %361 = vmatpush1.msra.mxu0 0.0
        %362 = vmatprep.subr.mxu0 0.0
        %363 = vmatpush1.msra.mxu0 0.0
        %364 = vmatprep.subr.mxu0 0.0
        %365 = vmatpush1.msra.mxu0 0.0
        %366 = vmatprep.subr.mxu0 0.0
        %367 = vmatpush1.msra.mxu0 0.0
        %368 = vmatprep.subr.mxu0 0.0
        %369 = vmatpush1.msra.mxu0 0.0
        %370 = vmatprep.subr.mxu0 0.0
        %371 = vmatpush1.msra.mxu0 0.0
        %372 = vmatprep.subr.mxu0 0.0
        %373 = vmatpush1.msra.mxu0 0.0
        %374 = vmatprep.subr.mxu0 0.0
        %375 = vmatpush1.msra.mxu0 0.0
        %376 = vmatprep.subr.mxu0 0.0
        %377 = vmatpush1.msra.mxu0 0.0
        %378 = vmatprep.subr.mxu0 0.0
        %379 = vmatpush1.msra.mxu0 0.0
        %380 = vmatprep.subr.mxu0 0.0
        %381 = vmatpush1.msra.mxu0 0.0
        %382 = vmatprep.subr.mxu0 0.0
        %383 = vmatpush1.msra.mxu0 0.0
        %384 = vmatprep.subr.mxu0 0.0
        %385 = vmatpush1.msra.mxu0 0.0
        %386 = vmatprep.subr.mxu0 0.0
        %387 = vmatpush1.msra.mxu0 0.0
        %388 = vmatprep.subr.mxu0 0.0
        %389 = vmatpush1.msra.mxu0 0.0
        %390 = vmatprep.subr.mxu0 0.0
        %391 = vmatpush1.msra.mxu0 0.0
        %392 = vmatprep.subr.mxu0 0.0
        %393 = vmatpush1.msra.mxu0 0.0
        %394 = vmatprep.subr.mxu0 0.0
        %395 = vmatpush1.msra.mxu0 0.0
        %396 = vmatprep.subr.mxu0 0.0
        %397 = vmatpush1.msra.mxu0 0.0
        %398 = vmatprep.subr.mxu0 0.0
        %399 = vmatpush1.msra.mxu0 0.0
        %400 = vmatprep.subr.mxu0 0.0
        %401 = vmatpush1.msra.mxu0 0.0
        %402 = vmatprep.subr.mxu0 0.0
        %403 = vmatpush1.msra.mxu0 0.0
        %404 = vmatprep.subr.mxu0 0.0
        %405 = vmatpush1.msra.mxu0 0.0
        %406 = vmatprep.subr.mxu0 0.0
        %407 = vmatpush1.msra.mxu0 0.0
        %408 = vmatprep.mubr.f32.mxu0 0.0
        %409 = vmatmul.mubr.f32.gmra.mrb[0].mxu0 %v339
        %v410 = vpop.f32.mrb[0].mxu0
        %v411 = vadd.f32 %v330, %v410
        %v412 = vpop.f32.mrb[0].mxu0
        %413 = vmatprep.mubr.f32.mxu0 0.0
        %414 = vmatmul.mubr.f32.gmra.mrb[0].mxu0 %v342
        %v415 = vpop.f32.mrb[0].mxu0
        %v416 = vadd.f32 %v335, %v415
        %v417 = vpop.f32.mrb[0].mxu0
        %418 = vdwg.mxu0
        %v419 = vld [vmem:[%s239] sm:$0xff]
        %v420 = vld [vmem:[%s239 + $0x8] sm:$0xff]
        %v421 = vld [vmem:[%s244 + $0x20] sm:$0xff]
        %v422 = vld [vmem:[%s244 + $0x28] sm:$0xff]
        %425 = vrot.lane.b32.xlu0 %v419, 127
        %v426 = vpop.permute.xlu0 %425
        %427 = vrot.lane.b32.xlu0 %v420, 127
        %v428 = vpop.permute.xlu0 %427
        %vm429 = vcmask 1039360
        %v430 = vsel %vm429, %v426, %v428
        %v433 = vsel %vm256, %v421, 0
        %v436 = vsel %vm256, %v422, 0
        %438 = vmatprep.subr.mxu0 0.0
        %439 = vmatpush1.msra.mxu0 %v430
        %440 = vmatprep.subr.mxu0 0.0
        %441 = vmatpush1.msra.mxu0 0.0
        %442 = vmatprep.subr.mxu0 0.0
        %443 = vmatpush1.msra.mxu0 0.0
        %444 = vmatprep.subr.mxu0 0.0
        %445 = vmatpush1.msra.mxu0 0.0
        %446 = vmatprep.subr.mxu0 0.0
        %447 = vmatpush1.msra.mxu0 0.0
        %448 = vmatprep.subr.mxu0 0.0
        %449 = vmatpush1.msra.mxu0 0.0
        %450 = vmatprep.subr.mxu0 0.0
        %451 = vmatpush1.msra.mxu0 0.0
        %452 = vmatprep.subr.mxu0 0.0
        %453 = vmatpush1.msra.mxu0 0.0
        %454 = vmatprep.subr.mxu0 0.0
        %455 = vmatpush1.msra.mxu0 0.0
        %456 = vmatprep.subr.mxu0 0.0
        %457 = vmatpush1.msra.mxu0 0.0
        %458 = vmatprep.subr.mxu0 0.0
        %459 = vmatpush1.msra.mxu0 0.0
        %460 = vmatprep.subr.mxu0 0.0
        %461 = vmatpush1.msra.mxu0 0.0
        %462 = vmatprep.subr.mxu0 0.0
        %463 = vmatpush1.msra.mxu0 0.0
        %464 = vmatprep.subr.mxu0 0.0
        %465 = vmatpush1.msra.mxu0 0.0
        %466 = vmatprep.subr.mxu0 0.0
        %467 = vmatpush1.msra.mxu0 0.0
        %468 = vmatprep.subr.mxu0 0.0
        %469 = vmatpush1.msra.mxu0 0.0
        %470 = vmatprep.subr.mxu0 0.0
        %471 = vmatpush1.msra.mxu0 0.0
        %472 = vmatprep.subr.mxu0 0.0
        %473 = vmatpush1.msra.mxu0 0.0
        %474 = vmatprep.subr.mxu0 0.0
        %475 = vmatpush1.msra.mxu0 0.0
        %476 = vmatprep.subr.mxu0 0.0
        %477 = vmatpush1.msra.mxu0 0.0
        %478 = vmatprep.subr.mxu0 0.0
        %479 = vmatpush1.msra.mxu0 0.0
        %480 = vmatprep.subr.mxu0 0.0
        %481 = vmatpush1.msra.mxu0 0.0
        %482 = vmatprep.subr.mxu0 0.0
        %483 = vmatpush1.msra.mxu0 0.0
        %484 = vmatprep.subr.mxu0 0.0
        %485 = vmatpush1.msra.mxu0 0.0
        %486 = vmatprep.subr.mxu0 0.0
        %487 = vmatpush1.msra.mxu0 0.0
        %488 = vmatprep.subr.mxu0 0.0
        %489 = vmatpush1.msra.mxu0 0.0
        %490 = vmatprep.subr.mxu0 0.0
        %491 = vmatpush1.msra.mxu0 0.0
        %492 = vmatprep.subr.mxu0 0.0
        %493 = vmatpush1.msra.mxu0 0.0
        %494 = vmatprep.subr.mxu0 0.0
        %495 = vmatpush1.msra.mxu0 0.0
        %496 = vmatprep.subr.mxu0 0.0
        %497 = vmatpush1.msra.mxu0 0.0
        %498 = vmatprep.subr.mxu0 0.0
        %499 = vmatpush1.msra.mxu0 0.0
        %500 = vmatprep.subr.mxu0 0.0
        %501 = vmatpush1.msra.mxu0 0.0
        %502 = vmatprep.mubr.f32.mxu0 0.0
        %503 = vmatmul.mubr.f32.gmra.mrb[0].mxu0 %v433
        %v504 = vpop.f32.mrb[0].mxu0
        %v505 = vadd.f32 0.0, %v504
        %v506 = vpop.f32.mrb[0].mxu0
        %507 = vmatprep.mubr.f32.mxu0 0.0
        %508 = vmatmul.mubr.f32.gmra.mrb[0].mxu0 %v436
        %v509 = vpop.f32.mrb[0].mxu0
        %v510 = vadd.f32 0.0, %v509
        %v511 = vpop.f32.mrb[0].mxu0
        %512 = vdwg.mxu0
        %v513 = vadd.f32 %v411, %v505
        %v514 = vadd.f32 %v416, %v510
        %v515 = vld [vmem:[%s239 + $0x20] sm:$0xff]
        %v516 = vld [vmem:[%s244 + $0x30] sm:$0xff]
        %v517 = vld [vmem:[%s244 + $0x38] sm:$0xff]
        %v519 = vsel %vm256, %v516, 0
        %v522 = vsel %vm256, %v517, 0
        %524 = vmatprep.subr.mxu0 0.0
        %525 = vmatpush1.msra.mxu0 %v515
        %526 = vmatprep.subr.mxu0 0.0
        %527 = vmatpush1.msra.mxu0 0.0
        %528 = vmatprep.subr.mxu0 0.0
        %529 = vmatpush1.msra.mxu0 0.0
        %530 = vmatprep.subr.mxu0 0.0
        %531 = vmatpush1.msra.mxu0 0.0
        %532 = vmatprep.subr.mxu0 0.0
        %533 = vmatpush1.msra.mxu0 0.0
        %534 = vmatprep.subr.mxu0 0.0
        %535 = vmatpush1.msra.mxu0 0.0
        %536 = vmatprep.subr.mxu0 0.0
        %537 = vmatpush1.msra.mxu0 0.0
        %538 = vmatprep.subr.mxu0 0.0
        %539 = vmatpush1.msra.mxu0 0.0
        %540 = vmatprep.subr.mxu0 0.0
        %541 = vmatpush1.msra.mxu0 0.0
        %542 = vmatprep.subr.mxu0 0.0
        %543 = vmatpush1.msra.mxu0 0.0
        %544 = vmatprep.subr.mxu0 0.0
        %545 = vmatpush1.msra.mxu0 0.0
        %546 = vmatprep.subr.mxu0 0.0
        %547 = vmatpush1.msra.mxu0 0.0
        %548 = vmatprep.subr.mxu0 0.0
        %549 = vmatpush1.msra.mxu0 0.0
        %550 = vmatprep.subr.mxu0 0.0
        %551 = vmatpush1.msra.mxu0 0.0
        %552 = vmatprep.subr.mxu0 0.0
        %553 = vmatpush1.msra.mxu0 0.0
        %554 = vmatprep.subr.mxu0 0.0
        %555 = vmatpush1.msra.mxu0 0.0
        %556 = vmatprep.subr.mxu0 0.0
        %557 = vmatpush1.msra.mxu0 0.0
        %558 = vmatprep.subr.mxu0 0.0
        %559 = vmatpush1.msra.mxu0 0.0
        %560 = vmatprep.subr.mxu0 0.0
        %561 = vmatpush1.msra.mxu0 0.0
        %562 = vmatprep.subr.mxu0 0.0
        %563 = vmatpush1.msra.mxu0 0.0
        %564 = vmatprep.subr.mxu0 0.0
        %565 = vmatpush1.msra.mxu0 0.0
        %566 = vmatprep.subr.mxu0 0.0
        %567 = vmatpush1.msra.mxu0 0.0
        %568 = vmatprep.subr.mxu0 0.0
        %569 = vmatpush1.msra.mxu0 0.0
        %570 = vmatprep.subr.mxu0 0.0
        %571 = vmatpush1.msra.mxu0 0.0
        %572 = vmatprep.subr.mxu0 0.0
        %573 = vmatpush1.msra.mxu0 0.0
        %574 = vmatprep.subr.mxu0 0.0
        %575 = vmatpush1.msra.mxu0 0.0
        %576 = vmatprep.subr.mxu0 0.0
        %577 = vmatpush1.msra.mxu0 0.0
        %578 = vmatprep.subr.mxu0 0.0
        %579 = vmatpush1.msra.mxu0 0.0
        %580 = vmatprep.subr.mxu0 0.0
        %581 = vmatpush1.msra.mxu0 0.0
        %582 = vmatprep.subr.mxu0 0.0
        %583 = vmatpush1.msra.mxu0 0.0
        %584 = vmatprep.subr.mxu0 0.0
        %585 = vmatpush1.msra.mxu0 0.0
        %586 = vmatprep.subr.mxu0 0.0
        %587 = vmatpush1.msra.mxu0 0.0
        %588 = vmatprep.mubr.f32.mxu0 0.0
        %589 = vmatmul.mubr.f32.gmra.mrb[0].mxu0 %v519
        %v590 = vpop.f32.mrb[0].mxu0
        %v591 = vadd.f32 0.0, %v590
        %v592 = vpop.f32.mrb[0].mxu0
        %593 = vmatprep.mubr.f32.mxu0 0.0
        %594 = vmatmul.mubr.f32.gmra.mrb[0].mxu0 %v522
        %v595 = vpop.f32.mrb[0].mxu0
        %v596 = vadd.f32 0.0, %v595
        %v597 = vpop.f32.mrb[0].mxu0
        %598 = vdwg.mxu0
        %v599 = vadd.f32 %v513, %v591
        %v600 = vadd.f32 %v514, %v596
        %v601 = vld [vmem:[%s239 + $0x30] sm:$0xff]
        %v602 = vld [vmem:[%s244 + $0x40] sm:$0xff]
        %v603 = vld [vmem:[%s244 + $0x48] sm:$0xff]
        %v605 = vsel %vm256, %v602, 0
        %v608 = vsel %vm256, %v603, 0
        %610 = vmatprep.subr.mxu0 0.0
        %611 = vmatpush1.msra.mxu0 %v601
        %612 = vmatprep.subr.mxu0 0.0
        %613 = vmatpush1.msra.mxu0 0.0
        %614 = vmatprep.subr.mxu0 0.0
        %615 = vmatpush1.msra.mxu0 0.0
        %616 = vmatprep.subr.mxu0 0.0
        %617 = vmatpush1.msra.mxu0 0.0
        %618 = vmatprep.subr.mxu0 0.0
        %619 = vmatpush1.msra.mxu0 0.0
        %620 = vmatprep.subr.mxu0 0.0
        %621 = vmatpush1.msra.mxu0 0.0
        %622 = vmatprep.subr.mxu0 0.0
        %623 = vmatpush1.msra.mxu0 0.0
        %624 = vmatprep.subr.mxu0 0.0
        %625 = vmatpush1.msra.mxu0 0.0
        %626 = vmatprep.subr.mxu0 0.0
        %627 = vmatpush1.msra.mxu0 0.0
        %628 = vmatprep.subr.mxu0 0.0
        %629 = vmatpush1.msra.mxu0 0.0
        %630 = vmatprep.subr.mxu0 0.0
        %631 = vmatpush1.msra.mxu0 0.0
        %632 = vmatprep.subr.mxu0 0.0
        %633 = vmatpush1.msra.mxu0 0.0
        %634 = vmatprep.subr.mxu0 0.0
        %635 = vmatpush1.msra.mxu0 0.0
        %636 = vmatprep.subr.mxu0 0.0
        %637 = vmatpush1.msra.mxu0 0.0
        %638 = vmatprep.subr.mxu0 0.0
        %639 = vmatpush1.msra.mxu0 0.0
        %640 = vmatprep.subr.mxu0 0.0
        %641 = vmatpush1.msra.mxu0 0.0
        %642 = vmatprep.subr.mxu0 0.0
        %643 = vmatpush1.msra.mxu0 0.0
        %644 = vmatprep.subr.mxu0 0.0
        %645 = vmatpush1.msra.mxu0 0.0
        %646 = vmatprep.subr.mxu0 0.0
        %647 = vmatpush1.msra.mxu0 0.0
        %648 = vmatprep.subr.mxu0 0.0
        %649 = vmatpush1.msra.mxu0 0.0
        %650 = vmatprep.subr.mxu0 0.0
        %651 = vmatpush1.msra.mxu0 0.0
        %652 = vmatprep.subr.mxu0 0.0
        %653 = vmatpush1.msra.mxu0 0.0
        %654 = vmatprep.subr.mxu0 0.0
        %655 = vmatpush1.msra.mxu0 0.0
        %656 = vmatprep.subr.mxu0 0.0
        %657 = vmatpush1.msra.mxu0 0.0
        %658 = vmatprep.subr.mxu0 0.0
        %659 = vmatpush1.msra.mxu0 0.0
        %660 = vmatprep.subr.mxu0 0.0
        %661 = vmatpush1.msra.mxu0 0.0
        %662 = vmatprep.subr.mxu0 0.0
        %663 = vmatpush1.msra.mxu0 0.0
        %664 = vmatprep.subr.mxu0 0.0
        %665 = vmatpush1.msra.mxu0 0.0
        %666 = vmatprep.subr.mxu0 0.0
        %667 = vmatpush1.msra.mxu0 0.0
        %668 = vmatprep.subr.mxu0 0.0
        %669 = vmatpush1.msra.mxu0 0.0
        %670 = vmatprep.subr.mxu0 0.0
        %671 = vmatpush1.msra.mxu0 0.0
        %672 = vmatprep.subr.mxu0 0.0
        %673 = vmatpush1.msra.mxu0 0.0
        %674 = vmatprep.mubr.f32.mxu0 0.0
        %675 = vmatmul.mubr.f32.gmra.mrb[0].mxu0 %v605
        %v676 = vpop.f32.mrb[0].mxu0
        %v677 = vadd.f32 0.0, %v676
        %v678 = vpop.f32.mrb[0].mxu0
        %679 = vmatprep.mubr.f32.mxu0 0.0
        %680 = vmatmul.mubr.f32.gmra.mrb[0].mxu0 %v608
        %v681 = vpop.f32.mrb[0].mxu0
        %v682 = vadd.f32 0.0, %v681
        %v683 = vpop.f32.mrb[0].mxu0
        %684 = vdwg.mxu0
        %v685 = vadd.f32 %v599, %v677
        %v686 = vadd.f32 %v600, %v682
        %v687 = vld [vmem:[%s239 + $0x20] sm:$0xff]
        %v688 = vld [vmem:[%s239 + $0x28] sm:$0xff]
        %v689 = vld [vmem:[%s244 + $0x50] sm:$0xff]
        %v690 = vld [vmem:[%s244 + $0x58] sm:$0xff]
        %693 = vrot.lane.b32.xlu0 %v687, 127
        %v694 = vpop.permute.xlu0 %693
        %695 = vrot.lane.b32.xlu0 %v688, 127
        %v696 = vpop.permute.xlu0 %695
        %v697 = vsel %vm429, %v694, %v696
        %v700 = vsel %vm256, %v689, 0
        %v703 = vsel %vm256, %v690, 0
        %705 = vmatprep.subr.mxu0 0.0
        %706 = vmatpush1.msra.mxu0 %v697
        %707 = vmatprep.subr.mxu0 0.0
        %708 = vmatpush1.msra.mxu0 0.0
        %709 = vmatprep.subr.mxu0 0.0
        %710 = vmatpush1.msra.mxu0 0.0
        %711 = vmatprep.subr.mxu0 0.0
        %712 = vmatpush1.msra.mxu0 0.0
        %713 = vmatprep.subr.mxu0 0.0
        %714 = vmatpush1.msra.mxu0 0.0
        %715 = vmatprep.subr.mxu0 0.0
        %716 = vmatpush1.msra.mxu0 0.0
        %717 = vmatprep.subr.mxu0 0.0
        %718 = vmatpush1.msra.mxu0 0.0
        %719 = vmatprep.subr.mxu0 0.0
        %720 = vmatpush1.msra.mxu0 0.0
        %721 = vmatprep.subr.mxu0 0.0
        %722 = vmatpush1.msra.mxu0 0.0
        %723 = vmatprep.subr.mxu0 0.0
        %724 = vmatpush1.msra.mxu0 0.0
        %725 = vmatprep.subr.mxu0 0.0
        %726 = vmatpush1.msra.mxu0 0.0
        %727 = vmatprep.subr.mxu0 0.0
        %728 = vmatpush1.msra.mxu0 0.0
        %729 = vmatprep.subr.mxu0 0.0
        %730 = vmatpush1.msra.mxu0 0.0
        %731 = vmatprep.subr.mxu0 0.0
        %732 = vmatpush1.msra.mxu0 0.0
        %733 = vmatprep.subr.mxu0 0.0
        %734 = vmatpush1.msra.mxu0 0.0
        %735 = vmatprep.subr.mxu0 0.0
        %736 = vmatpush1.msra.mxu0 0.0
        %737 = vmatprep.subr.mxu0 0.0
        %738 = vmatpush1.msra.mxu0 0.0
        %739 = vmatprep.subr.mxu0 0.0
        %740 = vmatpush1.msra.mxu0 0.0
        %741 = vmatprep.subr.mxu0 0.0
        %742 = vmatpush1.msra.mxu0 0.0
        %743 = vmatprep.subr.mxu0 0.0
        %744 = vmatpush1.msra.mxu0 0.0
        %745 = vmatprep.subr.mxu0 0.0
        %746 = vmatpush1.msra.mxu0 0.0
        %747 = vmatprep.subr.mxu0 0.0
        %748 = vmatpush1.msra.mxu0 0.0
        %749 = vmatprep.subr.mxu0 0.0
        %750 = vmatpush1.msra.mxu0 0.0
        %751 = vmatprep.subr.mxu0 0.0
        %752 = vmatpush1.msra.mxu0 0.0
        %753 = vmatprep.subr.mxu0 0.0
        %754 = vmatpush1.msra.mxu0 0.0
        %755 = vmatprep.subr.mxu0 0.0
        %756 = vmatpush1.msra.mxu0 0.0
        %757 = vmatprep.subr.mxu0 0.0
        %758 = vmatpush1.msra.mxu0 0.0
        %759 = vmatprep.subr.mxu0 0.0
        %760 = vmatpush1.msra.mxu0 0.0
        %761 = vmatprep.subr.mxu0 0.0
        %762 = vmatpush1.msra.mxu0 0.0
        %763 = vmatprep.subr.mxu0 0.0
        %764 = vmatpush1.msra.mxu0 0.0
        %765 = vmatprep.subr.mxu0 0.0
        %766 = vmatpush1.msra.mxu0 0.0
        %767 = vmatprep.subr.mxu0 0.0
        %768 = vmatpush1.msra.mxu0 0.0
        %769 = vmatprep.mubr.f32.mxu0 0.0
        %770 = vmatmul.mubr.f32.gmra.mrb[0].mxu0 %v700
        %v771 = vpop.f32.mrb[0].mxu0
        %v772 = vadd.f32 0.0, %v771
        %v773 = vpop.f32.mrb[0].mxu0
        %774 = vmatprep.mubr.f32.mxu0 0.0
        %775 = vmatmul.mubr.f32.gmra.mrb[0].mxu0 %v703
        %v776 = vpop.f32.mrb[0].mxu0
        %v777 = vadd.f32 0.0, %v776
        %v778 = vpop.f32.mrb[0].mxu0
        %779 = vdwg.mxu0
        %v780 = vadd.f32 %v685, %v772
        %v781 = vadd.f32 %v686, %v777
        %v782 = vld [vmem:[%s244 + $0x60] sm:$0xff]
        %v783 = vld [vmem:[%s244 + $0x68] sm:$0xff]
        %784 = vrot.lane.b32.xlu0 %v419, 119
        %v785 = vpop.permute.xlu0 %784
        %786 = vrot.lane.b32.xlu0 %v420, 119
        %v787 = vpop.permute.xlu0 %786
        %vm788 = vcmask 973824
        %v789 = vsel %vm788, %v785, %v787
        %v792 = vsel %vm256, %v782, 0
        %v795 = vsel %vm256, %v783, 0
        %797 = vmatprep.subr.mxu0 0.0
        %798 = vmatpush1.msra.mxu0 %v789
        %799 = vmatprep.subr.mxu0 0.0
        %800 = vmatpush1.msra.mxu0 0.0
        %801 = vmatprep.subr.mxu0 0.0
        %802 = vmatpush1.msra.mxu0 0.0
        %803 = vmatprep.subr.mxu0 0.0
        %804 = vmatpush1.msra.mxu0 0.0
        %805 = vmatprep.subr.mxu0 0.0
        %806 = vmatpush1.msra.mxu0 0.0
        %807 = vmatprep.subr.mxu0 0.0
        %808 = vmatpush1.msra.mxu0 0.0
        %809 = vmatprep.subr.mxu0 0.0
        %810 = vmatpush1.msra.mxu0 0.0
        %811 = vmatprep.subr.mxu0 0.0
        %812 = vmatpush1.msra.mxu0 0.0
        %813 = vmatprep.subr.mxu0 0.0
        %814 = vmatpush1.msra.mxu0 0.0
        %815 = vmatprep.subr.mxu0 0.0
        %816 = vmatpush1.msra.mxu0 0.0
        %817 = vmatprep.subr.mxu0 0.0
        %818 = vmatpush1.msra.mxu0 0.0
        %819 = vmatprep.subr.mxu0 0.0
        %820 = vmatpush1.msra.mxu0 0.0
        %821 = vmatprep.subr.mxu0 0.0
        %822 = vmatpush1.msra.mxu0 0.0
        %823 = vmatprep.subr.mxu0 0.0
        %824 = vmatpush1.msra.mxu0 0.0
        %825 = vmatprep.subr.mxu0 0.0
        %826 = vmatpush1.msra.mxu0 0.0
        %827 = vmatprep.subr.mxu0 0.0
        %828 = vmatpush1.msra.mxu0 0.0
        %829 = vmatprep.subr.mxu0 0.0
        %830 = vmatpush1.msra.mxu0 0.0
        %831 = vmatprep.subr.mxu0 0.0
        %832 = vmatpush1.msra.mxu0 0.0
        %833 = vmatprep.subr.mxu0 0.0
        %834 = vmatpush1.msra.mxu0 0.0
        %835 = vmatprep.subr.mxu0 0.0
        %836 = vmatpush1.msra.mxu0 0.0
        %837 = vmatprep.subr.mxu0 0.0
        %838 = vmatpush1.msra.mxu0 0.0
        %839 = vmatprep.subr.mxu0 0.0
        %840 = vmatpush1.msra.mxu0 0.0
        %841 = vmatprep.subr.mxu0 0.0
        %842 = vmatpush1.msra.mxu0 0.0
        %843 = vmatprep.subr.mxu0 0.0
        %844 = vmatpush1.msra.mxu0 0.0
        %845 = vmatprep.subr.mxu0 0.0
        %846 = vmatpush1.msra.mxu0 0.0
        %847 = vmatprep.subr.mxu0 0.0
        %848 = vmatpush1.msra.mxu0 0.0
        %849 = vmatprep.subr.mxu0 0.0
        %850 = vmatpush1.msra.mxu0 0.0
        %851 = vmatprep.subr.mxu0 0.0
        %852 = vmatpush1.msra.mxu0 0.0
        %853 = vmatprep.subr.mxu0 0.0
        %854 = vmatpush1.msra.mxu0 0.0
        %855 = vmatprep.subr.mxu0 0.0
        %856 = vmatpush1.msra.mxu0 0.0
        %857 = vmatprep.subr.mxu0 0.0
        %858 = vmatpush1.msra.mxu0 0.0
        %859 = vmatprep.subr.mxu0 0.0
        %860 = vmatpush1.msra.mxu0 0.0
        %861 = vmatprep.mubr.f32.mxu0 0.0
        %862 = vmatmul.mubr.f32.gmra.mrb[0].mxu0 %v792
        %v863 = vpop.f32.mrb[0].mxu0
        %v864 = vadd.f32 0.0, %v863
        %v865 = vpop.f32.mrb[0].mxu0
        %866 = vmatprep.mubr.f32.mxu0 0.0
        %867 = vmatmul.mubr.f32.gmra.mrb[0].mxu0 %v795
        %v868 = vpop.f32.mrb[0].mxu0
        %v869 = vadd.f32 0.0, %v868
        %v870 = vpop.f32.mrb[0].mxu0
        %871 = vdwg.mxu0
        %v872 = vadd.f32 %v780, %v864
        %v873 = vadd.f32 %v781, %v869
        %v874 = vld [vmem:[%s239 + $0x10] sm:$0xff]
        %v875 = vld [vmem:[%s239 + $0x18] sm:$0xff]
        %v876 = vld [vmem:[%s244 + $0x70] sm:$0xff]
        %v877 = vld [vmem:[%s244 + $0x78] sm:$0xff]
        %880 = vrot.lane.b32.xlu0 %v874, 119
        %v881 = vpop.permute.xlu0 %880
        %882 = vrot.lane.b32.xlu0 %v875, 119
        %v883 = vpop.permute.xlu0 %882
        %v884 = vsel %vm788, %v881, %v883
        %v887 = vsel %vm256, %v876, 0
        %v890 = vsel %vm256, %v877, 0
        %892 = vmatprep.subr.mxu0 0.0
        %893 = vmatpush1.msra.mxu0 %v884
        %894 = vmatprep.subr.mxu0 0.0
        %895 = vmatpush1.msra.mxu0 0.0
        %896 = vmatprep.subr.mxu0 0.0
        %897 = vmatpush1.msra.mxu0 0.0
        %898 = vmatprep.subr.mxu0 0.0
        %899 = vmatpush1.msra.mxu0 0.0
        %900 = vmatprep.subr.mxu0 0.0
        %901 = vmatpush1.msra.mxu0 0.0
        %902 = vmatprep.subr.mxu0 0.0
        %903 = vmatpush1.msra.mxu0 0.0
        %904 = vmatprep.subr.mxu0 0.0
        %905 = vmatpush1.msra.mxu0 0.0
        %906 = vmatprep.subr.mxu0 0.0
        %907 = vmatpush1.msra.mxu0 0.0
        %908 = vmatprep.subr.mxu0 0.0
        %909 = vmatpush1.msra.mxu0 0.0
        %910 = vmatprep.subr.mxu0 0.0
        %911 = vmatpush1.msra.mxu0 0.0
        %912 = vmatprep.subr.mxu0 0.0
        %913 = vmatpush1.msra.mxu0 0.0
        %914 = vmatprep.subr.mxu0 0.0
        %915 = vmatpush1.msra.mxu0 0.0
        %916 = vmatprep.subr.mxu0 0.0
        %917 = vmatpush1.msra.mxu0 0.0
        %918 = vmatprep.subr.mxu0 0.0
        %919 = vmatpush1.msra.mxu0 0.0
        %920 = vmatprep.subr.mxu0 0.0
        %921 = vmatpush1.msra.mxu0 0.0
        %922 = vmatprep.subr.mxu0 0.0
        %923 = vmatpush1.msra.mxu0 0.0
        %924 = vmatprep.subr.mxu0 0.0
        %925 = vmatpush1.msra.mxu0 0.0
        %926 = vmatprep.subr.mxu0 0.0
        %927 = vmatpush1.msra.mxu0 0.0
        %928 = vmatprep.subr.mxu0 0.0
        %929 = vmatpush1.msra.mxu0 0.0
        %930 = vmatprep.subr.mxu0 0.0
        %931 = vmatpush1.msra.mxu0 0.0
        %932 = vmatprep.subr.mxu0 0.0
        %933 = vmatpush1.msra.mxu0 0.0
        %934 = vmatprep.subr.mxu0 0.0
        %935 = vmatpush1.msra.mxu0 0.0
        %936 = vmatprep.subr.mxu0 0.0
        %937 = vmatpush1.msra.mxu0 0.0
        %938 = vmatprep.subr.mxu0 0.0
        %939 = vmatpush1.msra.mxu0 0.0
        %940 = vmatprep.subr.mxu0 0.0
        %941 = vmatpush1.msra.mxu0 0.0
        %942 = vmatprep.subr.mxu0 0.0
        %943 = vmatpush1.msra.mxu0 0.0
        %944 = vmatprep.subr.mxu0 0.0
        %945 = vmatpush1.msra.mxu0 0.0
        %946 = vmatprep.subr.mxu0 0.0
        %947 = vmatpush1.msra.mxu0 0.0
        %948 = vmatprep.subr.mxu0 0.0
        %949 = vmatpush1.msra.mxu0 0.0
        %950 = vmatprep.subr.mxu0 0.0
        %951 = vmatpush1.msra.mxu0 0.0
        %952 = vmatprep.subr.mxu0 0.0
        %953 = vmatpush1.msra.mxu0 0.0
        %954 = vmatprep.subr.mxu0 0.0
        %955 = vmatpush1.msra.mxu0 0.0
        %956 = vmatprep.mubr.f32.mxu0 0.0
        %957 = vmatmul.mubr.f32.gmra.mrb[0].mxu0 %v887
        %v958 = vpop.f32.mrb[0].mxu0
        %v959 = vadd.f32 0.0, %v958
        %v960 = vpop.f32.mrb[0].mxu0
        %961 = vmatprep.mubr.f32.mxu0 0.0
        %962 = vmatmul.mubr.f32.gmra.mrb[0].mxu0 %v890
        %v963 = vpop.f32.mrb[0].mxu0
        %v964 = vadd.f32 0.0, %v963
        %v965 = vpop.f32.mrb[0].mxu0
        %966 = vdwg.mxu0
        %v967 = vadd.f32 %v872, %v959
        %v968 = vadd.f32 %v873, %v964
        %v969 = vld [vmem:[%s244 + $0x80] sm:$0xff]
        %v970 = vld [vmem:[%s244 + $0x88] sm:$0xff]
        %971 = vrot.lane.b32.xlu0 %v419, 118
        %v972 = vpop.permute.xlu0 %971
        %973 = vrot.lane.b32.xlu0 %v420, 118
        %v974 = vpop.permute.xlu0 %973
        %vm975 = vcmask 965632
        %v976 = vsel %vm975, %v972, %v974
        %v979 = vsel %vm256, %v969, 0
        %v982 = vsel %vm256, %v970, 0
        %984 = vmatprep.subr.mxu0 0.0
        %985 = vmatpush1.msra.mxu0 %v976
        %986 = vmatprep.subr.mxu0 0.0
        %987 = vmatpush1.msra.mxu0 0.0
        %988 = vmatprep.subr.mxu0 0.0
        %989 = vmatpush1.msra.mxu0 0.0
        %990 = vmatprep.subr.mxu0 0.0
        %991 = vmatpush1.msra.mxu0 0.0
        %992 = vmatprep.subr.mxu0 0.0
        %993 = vmatpush1.msra.mxu0 0.0
        %994 = vmatprep.subr.mxu0 0.0
        %995 = vmatpush1.msra.mxu0 0.0
        %996 = vmatprep.subr.mxu0 0.0
        %997 = vmatpush1.msra.mxu0 0.0
        %998 = vmatprep.subr.mxu0 0.0
        %999 = vmatpush1.msra.mxu0 0.0
        %1000 = vmatprep.subr.mxu0 0.0
        %1001 = vmatpush1.msra.mxu0 0.0
        %1002 = vmatprep.subr.mxu0 0.0
        %1003 = vmatpush1.msra.mxu0 0.0
        %1004 = vmatprep.subr.mxu0 0.0
        %1005 = vmatpush1.msra.mxu0 0.0
        %1006 = vmatprep.subr.mxu0 0.0
        %1007 = vmatpush1.msra.mxu0 0.0
        %1008 = vmatprep.subr.mxu0 0.0
        %1009 = vmatpush1.msra.mxu0 0.0
        %1010 = vmatprep.subr.mxu0 0.0
        %1011 = vmatpush1.msra.mxu0 0.0
        %1012 = vmatprep.subr.mxu0 0.0
        %1013 = vmatpush1.msra.mxu0 0.0
        %1014 = vmatprep.subr.mxu0 0.0
        %1015 = vmatpush1.msra.mxu0 0.0
        %1016 = vmatprep.subr.mxu0 0.0
        %1017 = vmatpush1.msra.mxu0 0.0
        %1018 = vmatprep.subr.mxu0 0.0
        %1019 = vmatpush1.msra.mxu0 0.0
        %1020 = vmatprep.subr.mxu0 0.0
        %1021 = vmatpush1.msra.mxu0 0.0
        %1022 = vmatprep.subr.mxu0 0.0
        %1023 = vmatpush1.msra.mxu0 0.0
        %1024 = vmatprep.subr.mxu0 0.0
        %1025 = vmatpush1.msra.mxu0 0.0
        %1026 = vmatprep.subr.mxu0 0.0
        %1027 = vmatpush1.msra.mxu0 0.0
        %1028 = vmatprep.subr.mxu0 0.0
        %1029 = vmatpush1.msra.mxu0 0.0
        %1030 = vmatprep.subr.mxu0 0.0
        %1031 = vmatpush1.msra.mxu0 0.0
        %1032 = vmatprep.subr.mxu0 0.0
        %1033 = vmatpush1.msra.mxu0 0.0
        %1034 = vmatprep.subr.mxu0 0.0
        %1035 = vmatpush1.msra.mxu0 0.0
        %1036 = vmatprep.subr.mxu0 0.0
        %1037 = vmatpush1.msra.mxu0 0.0
        %1038 = vmatprep.subr.mxu0 0.0
        %1039 = vmatpush1.msra.mxu0 0.0
        %1040 = vmatprep.subr.mxu0 0.0
        %1041 = vmatpush1.msra.mxu0 0.0
        %1042 = vmatprep.subr.mxu0 0.0
        %1043 = vmatpush1.msra.mxu0 0.0
        %1044 = vmatprep.subr.mxu0 0.0
        %1045 = vmatpush1.msra.mxu0 0.0
        %1046 = vmatprep.subr.mxu0 0.0
        %1047 = vmatpush1.msra.mxu0 0.0
        %1048 = vmatprep.mubr.f32.mxu0 0.0
        %1049 = vmatmul.mubr.f32.gmra.mrb[0].mxu0 %v979
        %v1050 = vpop.f32.mrb[0].mxu0
        %v1051 = vadd.f32 0.0, %v1050
        %v1052 = vpop.f32.mrb[0].mxu0
        %1053 = vmatprep.mubr.f32.mxu0 0.0
        %1054 = vmatmul.mubr.f32.gmra.mrb[0].mxu0 %v982
        %v1055 = vpop.f32.mrb[0].mxu0
        %v1056 = vadd.f32 0.0, %v1055
        %v1057 = vpop.f32.mrb[0].mxu0
        %1058 = vdwg.mxu0
        %v1059 = vadd.f32 %v967, %v1051
        %v1060 = vadd.f32 %v968, %v1056
        %v1061 = vld [vmem:[%s249] sm:$0xff]
        %v1062 = vld [vmem:[%s249 + $0x8] sm:$0xff]
        %1064 = vset.pattern.permute.xlu0 0
        %1065 = vperm.xlu0 %1064, %v1061
        %v1066 = vpop.permute.xlu0 %1065
        %1069 = vset.pattern.permute.xlu0 0
        %1070 = vperm.xlu0 %1069, %v1062
        %v1071 = vpop.permute.xlu0 %1070
        %v1073 = vadd.f32 %v1059, %v1066
        %v1074 = vadd.f32 %v1060, %v1071
        %v1075 = vld [vmem:[%s3] sm:$0x1]
        %v1077 = vlaneseq
        %v1078 = vshrl.u32 %v1077, 7
        %v1079 = vsub.s32 0, %v1078
        %v1080 = vrot.slane %v1075, %v1079
        %v1082 = vmul.f32 %v1073, %v1080
        %v1083 = vmul.f32 %v1074, %v1080
        %1084 = vadd.xlane.f32.xlu0 %v1082
        %v1085 = vpop.xlane.xlu0 %1084
        %1086 = vadd.xlane.f32.xlu0 %v1083
        %v1087 = vpop.xlane.xlu0 %1086
        %v1088 = vmul.f32 %v1085, 0.015625
        %v1089 = vmul.f32 %v1087, 0.015625
        %v1090 = vsub.f32 %v1073, %v1088
        %v1091 = vsub.f32 %v1074, %v1089
        %v1092 = vmul.f32 %v1090, %v1080
        %v1093 = vmul.f32 %v1091, %v1080
        %v1094 = vmul.f32 %v1092, %v1092
        %v1095 = vmul.f32 %v1093, %v1093
        %1096 = vadd.xlane.f32.xlu0 %v1094
        %v1097 = vpop.xlane.xlu0 %1096
        %1098 = vadd.xlane.f32.xlu0 %v1095
        %v1099 = vpop.xlane.xlu0 %1098
        %v1100 = vmul.f32 %v1097, 0.015625
        %v1101 = vmul.f32 %v1099, 0.015625
        %v1102 = vadd.f32 %v1100, 1e-05
        %v1103 = vadd.f32 %v1101, 1e-05
        %v1104 = vrsqrt.pop %v1102
        %v1105 = vrsqrt.pop %v1103
        %v1106 = vmul.f32 %v1061, %v1104
        %v1107 = vmul.f32 %v1062, %v1105
        %v1108 = vmul.f32 %v1106, %v1088
        %v1109 = vmul.f32 %v1107, %v1089
        %1112 = vrot.lane.b32.xlu0 %v1108, 1
        %v1113 = vpop.permute.xlu0 %1112
        %1114 = vrot.lane.b32.xlu0 %v1109, 1
        %v1115 = vpop.permute.xlu0 %1114
        %v1118 = vsub.f32 %v1061, %v1113
        %v1119 = vsub.f32 %v1062, %v1115
        %1121 = vset.pattern.permute.xlu0 1
        %1122 = vperm.xlu0 %1121, %v1106
        %v1123 = vpop.permute.xlu0 %1122
        %1126 = vset.pattern.permute.xlu0 1
        %1127 = vperm.xlu0 %1126, %v1107
        %v1128 = vpop.permute.xlu0 %1127
        %v1130 = vmul.f32 %v1073, %v1123
        %v1131 = vmul.f32 %v1074, %v1128
        %1133 = vset.pattern.permute.xlu0 2
        %1134 = vperm.xlu0 %1133, %v1118
        %v1135 = vpop.permute.xlu0 %1134
        %1138 = vset.pattern.permute.xlu0 2
        %1139 = vperm.xlu0 %1138, %v1119
        %v1140 = vpop.permute.xlu0 %1139
        %v1142 = vadd.f32 %v1130, %v1135
        %v1143 = vadd.f32 %v1131, %v1140
        %v1144 = vxor.u32 %v1143, 2147483648
        %v1145 = vmul.f32 %v1144, 1.442695
        %v1146 = vpow.pop %v1145
        %v1147 = vadd.f32 %v1146, 1.0
        %v1148 = vrcp.pop %v1147
        %v1149 = vmul.f32 1.0, %v1148
        %v1150 = vmul.f32 %v1142, %v1149
        %1151 = vst [vmem:[%s234] sm:$0xff] %v1150
        %s1152 = sand.u32 %s139, 1
        %s1153 = scalar_lea.sflag [#allocation3], %s1152
        %s1154 = sand.u32 %s139, 1
        %s1155 = smul.addr %s1154, 8
        %s1156 = scalar_lea.vmem [#allocation2], %s1155
        // Predicated region
        $region37: #{tpu_custom_call.1} parent=35 // pred_check
          %p1157 = pneg %p149
        $region38: #{tpu_custom_call.1} parent=35 // pred_check_branch
          %1159 = sbr.rel (%p1157) target = $region40
        $region39: #{tpu_custom_call.1} parent=35 // pred_region
          %s1161 = ssub.s32 128, 128
          %1162 = vsyncadd %s1153, %s1161
          %s1163 = sadd.s32 %s23, %s22
          %s1164 = smul.addr %s1163, 128
          %s1165 = scalar_lea.hbm %s4, %s1164
          %s1167 = sshll.u32 %s1156, 4
          %s1168 = int_to_ptr.vmem [resolvable:$true] %s1167
          %1170 = dma.vmem_to_hbm [thread:$0]  %s1168, 128, %s1165, %s1153
        $region40: #{tpu_custom_call.1} parent=35 // pred_fallthru
          _
      $region36: #{tpu_custom_call.1} parent=5 // pred_fallthru
        _
      %p1171 = scmp.le.s32.totalorder 2, %s13
      // Predicated region
      $region41: #{tpu_custom_call.1} parent=5 // pred_check
        %p1172 = pneg %p1171
      $region42: #{tpu_custom_call.1} parent=5 // pred_check_branch
        %1174 = sbr.rel (%p1172) target = $region44
      $region43: #{tpu_custom_call.1} parent=5 // pred_region
        %s1175 = ssub.s32 %s13, 2
        // Predicated region
        $region45: #{tpu_custom_call.1} parent=43 // pred_check
          %p1176 = pneg %p155
        $region46: #{tpu_custom_call.1} parent=43 // pred_check_branch
          %1178 = sbr.rel (%p1176) target = $region48
        $region47: #{tpu_custom_call.1} parent=43 // pred_region
          %s1179 = sand.u32 %s140, 1
          %s1180 = scalar_lea.sflag [#allocation3], %s1179
          %s1181 = sand.u32 %s140, 1
          %s1182 = smul.addr %s1181, 8
          %s1183 = scalar_lea.vmem [#allocation2], %s1182
          %1184 = dma.done %s1180, 128
        $region48: #{tpu_custom_call.1} parent=43 // pred_fallthru
          _
      $region44: #{tpu_custom_call.1} parent=5 // pred_fallthru
        _
    $region6: #{tpu_custom_call.1} parent=1 // loop_footer
      %s17 = sadd.s32 1, %s13
    $region7: #{tpu_custom_call.1} parent=1 // loop_footer_branch
      %12 = sbr.rel target = $region3
    $region8: #{tpu_custom_call.1} parent=1 // loop_exit
      _
    %1185 = vsyncpa [#allocation3], 1
    %s1186 = scalar_lea.sflag [#allocation3], 1
    %1187 = vsyncpa %s1186, 1

</llo_original>
